<compile_context>
chip_gen: v7x
topology: tpu7x:2x2x1
jax: 0.10.0
libtpu: 0.0.40
codegen_flags: <defaults>
</compile_context>

<pallas_src>
import functools

import jax
import jax.numpy as jnp
from jax.experimental import pallas as pl
from jax.experimental.pallas import tpu as pltpu


def _gated_kernel_split(xa_ref, xb_ref, ca_ref, cb_ref, o_ref):
    # Even-channel (a) and odd-channel (b) windows arrive as separate tiles.
    a = (xa_ref[...] + ca_ref[...]).astype(jnp.float32)
    b = (xb_ref[...] + cb_ref[...]).astype(jnp.float32)
    o_ref[...] = (jax.nn.sigmoid(a) * jnp.tanh(b)).astype(o_ref.dtype)


def _gated_kernel_fused(x_ref, c_ref, o_ref, *, k):
    # Ragged-K path: each row tile is [even plane | odd plane]; split here.
    a = (x_ref[:, :k] + c_ref[:, :k]).astype(jnp.float32)
    b = (x_ref[:, k:] + c_ref[:, k:]).astype(jnp.float32)
    o_ref[...] = (jax.nn.sigmoid(a) * jnp.tanh(b)).astype(o_ref.dtype)


def gated_nonlinearity(inp, cond):
    """sigmoid(inp[:, ::2] + cond[:, ::2]) * tanh(inp[:, 1::2] + cond[:, 1::2])."""
    N, C, H, W = inp.shape
    assert cond.shape == inp.shape
    assert C % 2 == 0

    half = C // 2
    M = N * half
    K = H * W
    dtype = inp.dtype
    itemsize = jnp.dtype(dtype).itemsize
    sub = 8 * max(1, 4 // itemsize)      # sublane packing: 8 (f32), 16 (bf16), 32 (i8)

    # Free reshape of contiguous NCHW: row m = (batch n, channel-pair p), columns
    # are [even-channel H*W plane | odd-channel H*W plane].
    xv = inp.reshape(M, 2 * K)
    cv = cond.reshape(M, 2 * K)

    if K % 128 == 0:
        # ---------------- fast path: lane-aligned 2-D tiling ----------------
        # Largest lane tile that is a multiple of 128, divides K, capped at 1024.
        tk = max(d for d in range(128, min(K, 1024) + 1, 128) if K % d == 0)
        # ~1 MiB per tile buffer -> 5 streams * 2 buffers <= ~10 MiB VMEM.
        tm = max(256, (1 << 20) // (tk * itemsize))
        tm = min(tm, 1024)
        tm = max(sub, (tm // sub) * sub)
        if M <= tm:
            tm = M                        # full row extent (always legal)
        koff = K // tk                    # column-block offset of the odd half

        grid = (pl.cdiv(M, tm), koff)
        a_spec = pl.BlockSpec((tm, tk), lambda i, j: (i, j))           # even half
        b_spec = pl.BlockSpec((tm, tk), lambda i, j: (i, j + koff))    # odd half
        out_spec = pl.BlockSpec((tm, tk), lambda i, j: (i, j))

        out = pl.pallas_call(
            _gated_kernel_split,
            out_shape=jax.ShapeDtypeStruct((M, K), dtype),
            grid=grid,
            in_specs=[a_spec, b_spec, a_spec, b_spec],
            out_specs=out_spec,
            compiler_params=pltpu.CompilerParams(
                dimension_semantics=("parallel", "parallel"),
                vmem_limit_bytes=32 * 1024 * 1024,
            ),
        )(xv, xv, cv, cv)
    else:
        # -------------- ragged path: full-lane blocks, tile rows --------------
        per_row_bytes = 2 * (2 * 2 * K + K) * itemsize   # 2 bufs * (2 in * 2K + out * K)
        tm = max(sub, min(512, (12 << 20) // per_row_bytes))
        tm = max(sub, (tm // sub) * sub)
        if M <= tm:
            tm = M
        grid = (pl.cdiv(M, tm),)
        in_spec = pl.BlockSpec((tm, 2 * K), lambda i: (i, 0))
        out_spec = pl.BlockSpec((tm, K), lambda i: (i, 0))

        out = pl.pallas_call(
            functools.partial(_gated_kernel_fused, k=K),
            out_shape=jax.ShapeDtypeStruct((M, K), dtype),
            grid=grid,
            in_specs=[in_spec, in_spec],
            out_specs=out_spec,
            compiler_params=pltpu.CompilerParams(
                dimension_semantics=("parallel",),
                vmem_limit_bytes=32 * 1024 * 1024,
            ),
        )(xv, cv)

    return out.reshape(N, half, H, W)


def _reference(inp, cond):
    a = inp[:, 0::2] + cond[:, 0::2]
    b = inp[:, 1::2] + cond[:, 1::2]
    return jax.nn.sigmoid(a) * jnp.tanh(b)


if __name__ == "__main__":
    key = jax.random.PRNGKey(0)
    k1, k2, k3, k4 = jax.random.split(key, 4)

    # Test 1: lane-aligned spatial size (K = 256 -> fast path).
    N, C, H, W = 2, 4, 16, 16  # NCHW, matching PyTorch conv conventions
    x = jax.random.normal(k1, (N, C, H, W), dtype=jnp.float32)
    cond = jax.random.normal(k2, (N, C, H, W), dtype=jnp.float32)

    out = jax.block_until_ready(gated_nonlinearity(x, cond))
    ref = _reference(x, cond)
    assert out.shape == (N, C // 2, H, W)
    assert jnp.allclose(out, ref, atol=1e-5, rtol=1e-5)

    # Test 2: ragged spatial size (K = 144, not a multiple of 128 -> fallback path).
    H2, W2 = 12, 12
    x2 = jax.random.normal(k3, (N, C, H2, W2), dtype=jnp.float32)
    c2 = jax.random.normal(k4, (N, C, H2, W2), dtype=jnp.float32)

    out2 = jax.block_until_ready(gated_nonlinearity(x2, c2))
    ref2 = _reference(x2, c2)
    assert out2.shape == (N, C // 2, H2, W2)
    assert jnp.allclose(out2, ref2, atol=1e-5, rtol=1e-5)

    print("KERNEL_OK")
</pallas_src>

<mosaic_0001>
module attributes {stable_mosaic.version = 11 : i64} {
  func.func @_gated_kernel_split(%arg0: i32, %arg1: i32, %arg2: memref<4x256xf32, #tpu.memory_space<vmem>>, %arg3: memref<4x256xf32, #tpu.memory_space<vmem>>, %arg4: memref<4x256xf32, #tpu.memory_space<vmem>>, %arg5: memref<4x256xf32, #tpu.memory_space<vmem>>, %arg6: memref<4x256xf32, #tpu.memory_space<vmem>>) attributes {dimension_semantics = [#tpu.dimension_semantics<parallel>, #tpu.dimension_semantics<parallel>], iteration_bounds = array<i64: 1, 1>, scalar_prefetch = 0 : i64, scratch_operands = 0 : i64, tpu.core_type = #tpu.core_type<tc>, window_params = [{transform_indices = @transform_0, window_bounds = array<i64: 4, 256>}, {transform_indices = @transform_1, window_bounds = array<i64: 4, 256>}, {transform_indices = @transform_2, window_bounds = array<i64: 4, 256>}, {transform_indices = @transform_3, window_bounds = array<i64: 4, 256>}, {transform_indices = @transform_4, window_bounds = array<i64: 4, 256>}]} {
    %c0 = arith.constant 0 : index
    %c0_0 = arith.constant 0 : index
    %0 = vector.load %arg2[%c0, %c0_0] : memref<4x256xf32, #tpu.memory_space<vmem>>, vector<4x256xf32>
    %c0_1 = arith.constant 0 : index
    %c0_2 = arith.constant 0 : index
    %1 = vector.load %arg4[%c0_1, %c0_2] : memref<4x256xf32, #tpu.memory_space<vmem>>, vector<4x256xf32>
    %2 = arith.addf %0, %1 : vector<4x256xf32>
    %c0_3 = arith.constant 0 : index
    %c0_4 = arith.constant 0 : index
    %3 = vector.load %arg3[%c0_3, %c0_4] : memref<4x256xf32, #tpu.memory_space<vmem>>, vector<4x256xf32>
    %c0_5 = arith.constant 0 : index
    %c0_6 = arith.constant 0 : index
    %4 = vector.load %arg5[%c0_5, %c0_6] : memref<4x256xf32, #tpu.memory_space<vmem>>, vector<4x256xf32>
    %5 = arith.addf %3, %4 : vector<4x256xf32>
    %6 = arith.negf %2 : vector<4x256xf32>
    %7 = math.exp %6 : vector<4x256xf32>
    %cst = arith.constant 1.000000e+00 : f32
    %8 = vector.broadcast %cst : f32 to vector<4x256xf32>
    %9 = arith.addf %8, %7 : vector<4x256xf32>
    %10 = arith.divf %8, %9 : vector<4x256xf32>
    %11 = math.tanh %5 : vector<4x256xf32>
    %12 = arith.mulf %10, %11 : vector<4x256xf32>
    %c0_7 = arith.constant 0 : index
    %c0_8 = arith.constant 0 : index
    %13 = vector.load %arg6[%c0_7, %c0_8] : memref<4x256xf32, #tpu.memory_space<vmem>>, vector<4x256xf32>
    tpu.vector_store %arg6[%c0_7, %c0_8], %12 {strides = array<i32>} : memref<4x256xf32, #tpu.memory_space<vmem>>, vector<4x256xf32>,
    return
  }
  func.func @transform_0(%arg0: i32, %arg1: i32) -> (i32, i32) {
    %c0_i32 = arith.constant 0 : i32
    return %arg0, %arg1 : i32, i32
  }
  func.func @transform_1(%arg0: i32, %arg1: i32) -> (i32, i32) {
    %c1_i32 = arith.constant 1 : i32
    %0 = arith.addi %arg1, %c1_i32 : i32
    %c0_i32 = arith.constant 0 : i32
    return %arg0, %0 : i32, i32
  }
  func.func @transform_2(%arg0: i32, %arg1: i32) -> (i32, i32) {
    %c0_i32 = arith.constant 0 : i32
    return %arg0, %arg1 : i32, i32
  }
  func.func @transform_3(%arg0: i32, %arg1: i32) -> (i32, i32) {
    %c1_i32 = arith.constant 1 : i32
    %0 = arith.addi %arg1, %c1_i32 : i32
    %c0_i32 = arith.constant 0 : i32
    return %arg0, %0 : i32, i32
  }
  func.func @transform_4(%arg0: i32, %arg1: i32) -> (i32, i32) {
    %c0_i32 = arith.constant 0 : i32
    return %arg0, %arg1 : i32, i32
  }
}

</mosaic_0001>

<llo_original>
// kernel: tpu_custom_call.1
$region0: #{tpu_custom_call.1}
  #allocation0 [shape = 'u32[]', space=smem, size = 0x4, offset = 0x4, fixed_abs, tag = 'smem constant byte address 0x4 - core index']
  #allocation1 [shape = 'u32[144,128]{1,0:T(1,128)}', space=vmem, size = 0x12000, scoped, tag = 'internal scratch']
  %s0 = inlined_call_operand.hbm [shape: f32[4,512], index: 0, kind: input, shape index: {}]
  %s1 = inlined_call_operand.hbm [shape: f32[4,512], index: 1, kind: input, shape index: {}]
  %s2 = inlined_call_operand.hbm [shape: f32[4,512], index: 2, kind: input, shape index: {}]
  %s3 = inlined_call_operand.hbm [shape: f32[4,512], index: 3, kind: input, shape index: {}]
  %s4 = inlined_call_operand.hbm [shape: f32[4,256], index: 4, kind: output, shape index: {}]
  %s5 = sld [smem:[#allocation0]]
  $region42: #{tpu_custom_call.1} parent=0
    _
  %s7 = ssub.s32 1, %s5
  %s8 = scalar_select 0, %s7, %s5
  $region1: #{tpu_custom_call.1} parent=0
    #allocation2 [shape = 'u8[4096]{0}', space=vmem, size = 0x1000, scoped, tag = 'input window, operand 0, single buffered']
    #allocation3 [shape = 's32[1]{0}', space=sflag, size = 0x4, scoped, tag = 'scoped memory for tpu_custom_call.1']
    #allocation4 [shape = 's32[1]{0}', space=sflag, size = 0x4, scoped, tag = 'scoped memory for tpu_custom_call.1']
    #allocation5 [shape = 'u8[4096]{0}', space=vmem, size = 0x1000, scoped, tag = 'input window, operand 1, single buffered']
    #allocation6 [shape = 's32[1]{0}', space=sflag, size = 0x4, scoped, tag = 'scoped memory for tpu_custom_call.1']
    #allocation7 [shape = 'u8[4096]{0}', space=vmem, size = 0x1000, scoped, tag = 'input window, operand 2, single buffered']
    #allocation8 [shape = 'u8[4096]{0}', space=vmem, size = 0x1000, scoped, tag = 'input window, operand 3, single buffered']
    #allocation9 [shape = 's32[1]{0}', space=sflag, size = 0x4, scoped, tag = 'scoped memory for tpu_custom_call.1']
    #allocation10 [shape = 'u8[4096]{0}', space=vmem, size = 0x1000, scoped, tag = 'output window, operand 0, single buffered']
    %9 = vsyncpa [#allocation3], 0
    %10 = vsyncpa [#allocation6], 0
    %11 = vsyncpa [#allocation9], 0
    %12 = vsyncpa [#allocation4], 0
    // Predicated region
    $region2: #{tpu_custom_call.1} parent=1 // pred_check
      _
    $region3: #{tpu_custom_call.1} parent=1 // pred_check_branch
      %14 = sbr.rel (0) target = $region5
    $region4: #{tpu_custom_call.1} parent=1 // pred_region
      %s16 = ssub.s32 128, 128
      %17 = vsyncadd [#allocation3], %s16
      %s19 = sshll.u32 [#allocation2], 4
      %s20 = int_to_ptr.vmem [resolvable:$true] %s19
      %22 = dma.hbm_to_vmem [thread:$0]  %s0, 128, %s20, [#allocation3]
    $region5: #{tpu_custom_call.1} parent=1 // pred_fallthru
      _
    // Predicated region
    $region6: #{tpu_custom_call.1} parent=1 // pred_check
      _
    $region7: #{tpu_custom_call.1} parent=1 // pred_check_branch
      %24 = sbr.rel (0) target = $region9
    $region8: #{tpu_custom_call.1} parent=1 // pred_region
      %s25 = sadd.s32 0, 1
      %s26 = smul.u32 2, %s25
      %s28 = ssub.s32 128, 128
      %29 = vsyncadd [#allocation6], %s28
      %s30 = smul.addr %s26, 64
      %s31 = scalar_lea.hbm %s1, %s30
      %s33 = sshll.u32 [#allocation5], 4
      %s34 = int_to_ptr.vmem [resolvable:$true] %s33
      %36 = dma.hbm_to_vmem [thread:$0]  %s31, 128, %s34, [#allocation6]
    $region9: #{tpu_custom_call.1} parent=1 // pred_fallthru
      _
    // Predicated region
    $region10: #{tpu_custom_call.1} parent=1 // pred_check
      _
    $region11: #{tpu_custom_call.1} parent=1 // pred_check_branch
      %38 = sbr.rel (0) target = $region13
    $region12: #{tpu_custom_call.1} parent=1 // pred_region
      %s40 = ssub.s32 128, 128
      %41 = vsyncadd [#allocation6], %s40
      %s43 = sshll.u32 [#allocation7], 4
      %s44 = int_to_ptr.vmem [resolvable:$true] %s43
      %46 = dma.hbm_to_vmem [thread:$0]  %s2, 128, %s44, [#allocation6]
    $region13: #{tpu_custom_call.1} parent=1 // pred_fallthru
      _
    // Predicated region
    $region14: #{tpu_custom_call.1} parent=1 // pred_check
      _
    $region15: #{tpu_custom_call.1} parent=1 // pred_check_branch
      %48 = sbr.rel (0) target = $region17
    $region16: #{tpu_custom_call.1} parent=1 // pred_region
      %s49 = sadd.s32 0, 1
      %s50 = smul.u32 2, %s49
      %s52 = ssub.s32 128, 128
      %53 = vsyncadd [#allocation9], %s52
      %s54 = smul.addr %s50, 64
      %s55 = scalar_lea.hbm %s3, %s54
      %s57 = sshll.u32 [#allocation8], 4
      %s58 = int_to_ptr.vmem [resolvable:$true] %s57
      %60 = dma.hbm_to_vmem [thread:$0]  %s55, 128, %s58, [#allocation9]
    $region17: #{tpu_custom_call.1} parent=1 // pred_fallthru
      _
    // Predicated region
    $region18: #{tpu_custom_call.1} parent=1 // pred_check
      _
    $region19: #{tpu_custom_call.1} parent=1 // pred_check_branch
      %62 = sbr.rel (0) target = $region21
    $region20: #{tpu_custom_call.1} parent=1 // pred_region
      %63 = dma.done [#allocation3], 128
    $region21: #{tpu_custom_call.1} parent=1 // pred_fallthru
      _
    // Predicated region
    $region22: #{tpu_custom_call.1} parent=1 // pred_check
      _
    $region23: #{tpu_custom_call.1} parent=1 // pred_check_branch
      %65 = sbr.rel (0) target = $region25
    $region24: #{tpu_custom_call.1} parent=1 // pred_region
      %66 = dma.done [#allocation6], 128
    $region25: #{tpu_custom_call.1} parent=1 // pred_fallthru
      _
    // Predicated region
    $region26: #{tpu_custom_call.1} parent=1 // pred_check
      _
    $region27: #{tpu_custom_call.1} parent=1 // pred_check_branch
      %68 = sbr.rel (0) target = $region29
    $region28: #{tpu_custom_call.1} parent=1 // pred_region
      %69 = dma.done [#allocation6], 128
    $region29: #{tpu_custom_call.1} parent=1 // pred_fallthru
      _
    // Predicated region
    $region30: #{tpu_custom_call.1} parent=1 // pred_check
      _
    $region31: #{tpu_custom_call.1} parent=1 // pred_check_branch
      %71 = sbr.rel (0) target = $region33
    $region32: #{tpu_custom_call.1} parent=1 // pred_region
      %72 = dma.done [#allocation9], 128
    $region33: #{tpu_custom_call.1} parent=1 // pred_fallthru
      _
    %s73 = sadd.s32 0, 1
    %s74 = smul.u32 2, %s73
    %s75 = sadd.s32 0, 1
    %s76 = smul.u32 2, %s75
    %v77 = vld [vmem:[#allocation2] sm:$0xff]
    %v78 = vld [vmem:[#allocation7] sm:$0xff]
    %v79 = vadd.f32 %v77, %v78
    %v80 = vld [vmem:[#allocation5] sm:$0xff]
    %v81 = vld [vmem:[#allocation8] sm:$0xff]
    %v82 = vadd.f32 %v80, %v81
    %v83 = vxor.u32 %v79, 2147483648
    %v84 = vmul.f32 %v83, 1.442695
    %v85 = vpow.pop %v84
    %v86 = vadd.f32 %v85, 1.0
    %v87 = vrcp.pop %v86
    %v88 = vmul.f32 1.0, %v87
    %v89 = vtanh.pop %v82
    %v90 = vmul.f32 %v88, %v89
    %91 = vst [vmem:[#allocation10] sm:$0xff] %v90
    // Predicated region
    $region34: #{tpu_custom_call.1} parent=1 // pred_check
      _
    $region35: #{tpu_custom_call.1} parent=1 // pred_check_branch
      %93 = sbr.rel (0) target = $region37
    $region36: #{tpu_custom_call.1} parent=1 // pred_region
      %s95 = ssub.s32 128, 128
      %96 = vsyncadd [#allocation4], %s95
      %s98 = sshll.u32 [#allocation10], 4
      %s99 = int_to_ptr.vmem [resolvable:$true] %s98
      %101 = dma.vmem_to_hbm [thread:$0]  %s99, 128, %s4, [#allocation4]
    $region37: #{tpu_custom_call.1} parent=1 // pred_fallthru
      _
    // Predicated region
    $region38: #{tpu_custom_call.1} parent=1 // pred_check
      _
    $region39: #{tpu_custom_call.1} parent=1 // pred_check_branch
      %103 = sbr.rel (0) target = $region41
    $region40: #{tpu_custom_call.1} parent=1 // pred_region
      %104 = dma.done [#allocation4], 128
    $region41: #{tpu_custom_call.1} parent=1 // pred_fallthru
      _
    %105 = vsyncpa [#allocation3], 1
    %106 = vsyncpa [#allocation6], 1
    %107 = vsyncpa [#allocation9], 1
    %108 = vsyncpa [#allocation4], 1

</llo_original>
